<compile_context>
chip_gen: v7x
topology: tpu7x:2x2x1
jax: 0.10.0
libtpu: 0.0.40
codegen_flags: <defaults>
</compile_context>

<pallas_src>
import functools

import jax
import jax.numpy as jnp
from jax.experimental import pallas as pl
from jax.experimental.pallas import tpu as pltpu


def _shift_time(a, s, T, t_idx):
    """Zero-padded shift along the lane (time) axis: out[., t] = a[., t - s]."""
    if s == 0:
        return a
    r = pltpu.roll(a, shift=s % T, axis=1)                    # circular lane rotate (XLU)
    if s > 0:
        return jnp.where(t_idx >= s, r, jnp.zeros_like(r))    # zero the wrapped head
    return jnp.where(t_idx < T + s, r, jnp.zeros_like(r))     # zero the wrapped tail


def _enhance_kernel(x_ref, wenc_ref, benc_ref, wmask_ref, bmask_ref,
                    wdec_ref, bdec_ref, o_ref, *, T, K, Cin, H, Cout, pad):
    """Fused forward for one batch element. Time on lanes everywhere.

    x_ref    : [1, Cin, T]    noisy input, NCW (PyTorch layout, no transpose)
    wenc_ref : [H, K*Cin]     encoder taps, column (k*Cin + c) == W_enc[:, c, k]
    benc_ref : [H, 1]
    wmask_ref: [H, H]         1x1 conv weight (out, in)
    bmask_ref: [H, 1]
    wdec_ref : [K*Cout, H]    decoder taps, row (k*Cout + o) == W_dec[o, :, k]
    bdec_ref : [Cout, 1]
    o_ref    : [1, Cout, T]
    """
    x = x_ref[0]                                              # [Cin, T]
    t_idx = jax.lax.broadcasted_iota(jnp.int32, (1, T), 1)    # hoisted shift-mask index

    # --- Encoder Conv1d(Cin->H, K, 'same'): K*Cin VPU broadcast-FMAs.
    wenc = wenc_ref[...]                                      # [H, K*Cin]
    h = jnp.zeros((H, T), jnp.float32) + benc_ref[...]        # [H, T]
    for k in range(K):                                        # static unroll
        xs = _shift_time(x, pad - k, T, t_idx)                # [Cin, T]
        for c in range(Cin):
            idx = k * Cin + c
            # [H,1] * [1,T] broadcast FMA -> [H,T]
            h = h + wenc[:, idx:idx + 1] * xs[c:c + 1, :]
    h = jnp.maximum(h, 0.0)                                   # ReLU

    # --- 1x1 conv mask + sigmoid gating: one MXU dot (contraction H), EUP sigmoid.
    m = jax.nn.sigmoid(
        jnp.dot(wmask_ref[...], h, preferred_element_type=jnp.float32)
        + bmask_ref[...])
    hm = h * m

    # --- Decoder Conv1d(H->Cout, K, 'same'): channel contraction FIRST (one MXU dot),
    # then K lane shifts on tiny [Cout, T] slices. No [K*H, T] im2col buffer.
    u = jnp.dot(wdec_ref[...], hm, preferred_element_type=jnp.float32)   # [K*Cout, T]
    y = jnp.zeros((Cout, T), jnp.float32) + bdec_ref[...]                # [Cout, T]
    for k in range(K):
        y = y + _shift_time(u[k * Cout:(k + 1) * Cout, :], pad - k, T, t_idx)
    o_ref[0] = y.astype(o_ref.dtype)


def binaural_enhance(noisy, params):
    """noisy: [B, Cin, T] float32 (PyTorch NCW). Returns enhanced [B, Cout, T]."""
    w_enc, b_enc, w_mask, b_mask, w_dec, b_dec = params  # PyTorch Conv1d layouts
    B, Cin, T = noisy.shape
    H, _, K = w_enc.shape
    Cout = w_dec.shape[0]
    pad = K // 2

    # One-time, tiny weight re-layouts for the time-on-lanes kernel math.
    wenc_t = jnp.transpose(w_enc, (0, 2, 1)).reshape(H, K * Cin)     # [H, K*Cin]
    wdec_r = jnp.transpose(w_dec, (2, 0, 1)).reshape(K * Cout, H)    # [K*Cout, H]
    benc_c = b_enc.reshape(H, 1)
    bmask_c = b_mask.reshape(H, 1)
    bdec_c = b_dec.reshape(Cout, 1)

    kernel = functools.partial(_enhance_kernel, T=T, K=K, Cin=Cin, H=H, Cout=Cout, pad=pad)

    return pl.pallas_call(
        kernel,
        out_shape=jax.ShapeDtypeStruct((B, Cout, T), jnp.float32),
        grid_spec=pltpu.PrefetchScalarGridSpec(
            num_scalar_prefetch=0,
            grid=(B,),
            in_specs=[
                pl.BlockSpec((1, Cin, T), lambda b: (b, 0, 0)),
                pl.BlockSpec((H, K * Cin), lambda b: (0, 0)),
                pl.BlockSpec((H, 1), lambda b: (0, 0)),
                pl.BlockSpec((H, H), lambda b: (0, 0)),
                pl.BlockSpec((H, 1), lambda b: (0, 0)),
                pl.BlockSpec((K * Cout, H), lambda b: (0, 0)),
                pl.BlockSpec((Cout, 1), lambda b: (0, 0)),
            ],
            out_specs=pl.BlockSpec((1, Cout, T), lambda b: (b, 0, 0)),
        ),
        compiler_params=pltpu.CompilerParams(
            dimension_semantics=("parallel",)),
    )(noisy, wenc_t, benc_c, w_mask, bmask_c, wdec_r, bdec_c)


def reference_enhance(noisy, params):
    """Pure-JAX reference (same math, NCW layout) for correctness checking."""
    w_enc, b_enc, w_mask, b_mask, w_dec, b_dec = params
    B, Cin, T = noisy.shape
    H, _, K = w_enc.shape
    Cout = w_dec.shape[0]
    pad = K // 2
    xp = jnp.pad(noisy, ((0, 0), (0, 0), (pad, pad)))
    h = jnp.zeros((B, H, T), jnp.float32) + b_enc[None, :, None]
    for k in range(K):
        h = h + jnp.einsum('jc,bct->bjt', w_enc[:, :, k], xp[:, :, k:k + T])
    h = jnp.maximum(h, 0.0)
    m = jax.nn.sigmoid(jnp.einsum('gj,bjt->bgt', w_mask, h) + b_mask[None, :, None])
    hm = h * m
    hp = jnp.pad(hm, ((0, 0), (0, 0), (pad, pad)))
    y = jnp.zeros((B, Cout, T), jnp.float32) + b_dec[None, :, None]
    for k in range(K):
        y = y + jnp.einsum('oj,bjt->bot', w_dec[:, :, k], hp[:, :, k:k + T])
    return y


def init_params(key, Cin, H, Cout, K):
    """PyTorch Conv1d weight layouts: (out_channels, in_channels, kernel)."""
    ks = jax.random.split(key, 3)
    w_enc = 0.1 * jax.random.normal(ks[0], (H, Cin, K), jnp.float32)
    b_enc = 0.01 * jnp.ones((H,), jnp.float32)
    w_mask = 0.1 * jax.random.normal(ks[1], (H, H), jnp.float32)
    b_mask = jnp.zeros((H,), jnp.float32)
    w_dec = 0.1 * jax.random.normal(ks[2], (Cout, H, K), jnp.float32)
    b_dec = jnp.zeros((Cout,), jnp.float32)
    return (w_enc, b_enc, w_mask, b_mask, w_dec, b_dec)


if __name__ == "__main__":
    # Small shapes: batch=2, binaural channels=2, waveform length T=256 (lane-aligned),
    # hidden=32, kernel=5.
    B, Cin, T, H, Cout, K = 2, 2, 256, 32, 2, 5

    key = jax.random.PRNGKey(0)
    k_x, k_p = jax.random.split(key)
    noisy = jax.random.normal(k_x, (B, Cin, T), jnp.float32)   # [B, 2, T]  (NCW)
    params = init_params(k_p, Cin, H, Cout, K)

    out = binaural_enhance(noisy, params)
    out = jax.block_until_ready(out)

    ref = reference_enhance(noisy, params)
    assert out.shape == (B, Cout, T)
    assert jnp.allclose(out, ref, atol=1e-4, rtol=1e-4), "mismatch vs reference"

    print("KERNEL_OK")
</pallas_src>

<mosaic_0001>
module attributes {stable_mosaic.version = 11 : i64} {
  func.func @_enhance_kernel(%arg0: i32, %arg1: memref<1x2x256xf32, #tpu.memory_space<vmem>>, %arg2: memref<32x10xf32, #tpu.memory_space<vmem>>, %arg3: memref<32x1xf32, #tpu.memory_space<vmem>>, %arg4: memref<32x32xf32, #tpu.memory_space<vmem>>, %arg5: memref<32x1xf32, #tpu.memory_space<vmem>>, %arg6: memref<10x32xf32, #tpu.memory_space<vmem>>, %arg7: memref<2x1xf32, #tpu.memory_space<vmem>>, %arg8: memref<1x2x256xf32, #tpu.memory_space<vmem>>) attributes {dimension_semantics = [#tpu.dimension_semantics<parallel>], iteration_bounds = array<i64: 2>, scalar_prefetch = 0 : i64, scratch_operands = 0 : i64, tpu.core_type = #tpu.core_type<tc>, window_params = [{transform_indices = @transform_0, window_bounds = array<i64: 1, 2, 256>}, {pipeline_mode = #tpu.pipeline_mode<synchronous>, transform_indices = @transform_1, window_bounds = array<i64: 32, 10>}, {pipeline_mode = #tpu.pipeline_mode<synchronous>, transform_indices = @transform_2, window_bounds = array<i64: 32, 1>}, {pipeline_mode = #tpu.pipeline_mode<synchronous>, transform_indices = @transform_3, window_bounds = array<i64: 32, 32>}, {pipeline_mode = #tpu.pipeline_mode<synchronous>, transform_indices = @transform_4, window_bounds = array<i64: 32, 1>}, {pipeline_mode = #tpu.pipeline_mode<synchronous>, transform_indices = @transform_5, window_bounds = array<i64: 10, 32>}, {pipeline_mode = #tpu.pipeline_mode<synchronous>, transform_indices = @transform_6, window_bounds = array<i64: 2, 1>}, {transform_indices = @transform_7, window_bounds = array<i64: 1, 2, 256>}]} {
    %c0 = arith.constant 0 : index
    %c0_0 = arith.constant 0 : index
    %c0_1 = arith.constant 0 : index
    %0 = vector.load %arg1[%c0, %c0_0, %c0_1] : memref<1x2x256xf32, #tpu.memory_space<vmem>>, vector<1x2x256xf32>
    %1 = vector.shape_cast %0 : vector<1x2x256xf32> to vector<2x256xf32>
    %2 = tpu.iota {dimensions = array<i32: 1>} : vector<1x256xi32>
    %c0_2 = arith.constant 0 : index
    %c0_3 = arith.constant 0 : index
    %3 = vector.load %arg2[%c0_2, %c0_3] : memref<32x10xf32, #tpu.memory_space<vmem>>, vector<32x10xf32>
    %cst = arith.constant 0.000000e+00 : f32
    %4 = vector.broadcast %cst : f32 to vector<32x256xf32>
    %c0_4 = arith.constant 0 : index
    %c0_5 = arith.constant 0 : index
    %5 = vector.load %arg3[%c0_4, %c0_5] : memref<32x1xf32, #tpu.memory_space<vmem>>, vector<32x1xf32>
    %6 = vector.broadcast %5 : vector<32x1xf32> to vector<32x256xf32>
    %7 = arith.addf %4, %6 : vector<32x256xf32>
    %c2_i32 = arith.constant 2 : i32
    %8 = tpu.dynamic_rotate %1 by %c2_i32 dim 1 : vector<2x256xf32>, i32 -> vector<2x256xf32>
    %c2_i32_6 = arith.constant 2 : i32
    %9 = vector.broadcast %c2_i32_6 : i32 to vector<1x256xi32>
    %10 = arith.cmpi sge, %2, %9 : vector<1x256xi32>
    %cst_7 = arith.constant 0.000000e+00 : f32
    %11 = vector.broadcast %cst_7 : f32 to vector<2x256xf32>
    %12 = vector.shape_cast %10 : vector<1x256xi1> to vector<1x256xi1>
    %13 = vector.broadcast %12 : vector<1x256xi1> to vector<2x256xi1>
    %14 = arith.select %13, %8, %11 : vector<2x256xi1>, vector<2x256xf32>
    %15 = vector.extract_strided_slice %3 {offsets = [0, 0], sizes = [32, 1], strides = [1, 1]} : vector<32x10xf32> to vector<32x1xf32>
    %16 = vector.extract_strided_slice %14 {offsets = [0, 0], sizes = [1, 256], strides = [1, 1]} : vector<2x256xf32> to vector<1x256xf32>
    %17 = vector.broadcast %15 : vector<32x1xf32> to vector<32x256xf32>
    %18 = vector.broadcast %16 : vector<1x256xf32> to vector<32x256xf32>
    %19 = arith.mulf %17, %18 : vector<32x256xf32>
    %20 = arith.addf %7, %19 : vector<32x256xf32>
    %21 = vector.extract_strided_slice %3 {offsets = [0, 1], sizes = [32, 1], strides = [1, 1]} : vector<32x10xf32> to vector<32x1xf32>
    %22 = vector.extract_strided_slice %14 {offsets = [1, 0], sizes = [1, 256], strides = [1, 1]} : vector<2x256xf32> to vector<1x256xf32>
    %23 = vector.broadcast %21 : vector<32x1xf32> to vector<32x256xf32>
    %24 = vector.broadcast %22 : vector<1x256xf32> to vector<32x256xf32>
    %25 = arith.mulf %23, %24 : vector<32x256xf32>
    %26 = arith.addf %20, %25 : vector<32x256xf32>
    %c1_i32 = arith.constant 1 : i32
    %27 = tpu.dynamic_rotate %1 by %c1_i32 dim 1 : vector<2x256xf32>, i32 -> vector<2x256xf32>
    %c1_i32_8 = arith.constant 1 : i32
    %28 = vector.broadcast %c1_i32_8 : i32 to vector<1x256xi32>
    %29 = arith.cmpi sge, %2, %28 : vector<1x256xi32>
    %cst_9 = arith.constant 0.000000e+00 : f32
    %30 = vector.broadcast %cst_9 : f32 to vector<2x256xf32>
    %31 = vector.shape_cast %29 : vector<1x256xi1> to vector<1x256xi1>
    %32 = vector.broadcast %31 : vector<1x256xi1> to vector<2x256xi1>
    %33 = arith.select %32, %27, %30 : vector<2x256xi1>, vector<2x256xf32>
    %34 = vector.extract_strided_slice %3 {offsets = [0, 2], sizes = [32, 1], strides = [1, 1]} : vector<32x10xf32> to vector<32x1xf32>
    %35 = vector.extract_strided_slice %33 {offsets = [0, 0], sizes = [1, 256], strides = [1, 1]} : vector<2x256xf32> to vector<1x256xf32>
    %36 = vector.broadcast %34 : vector<32x1xf32> to vector<32x256xf32>
    %37 = vector.broadcast %35 : vector<1x256xf32> to vector<32x256xf32>
    %38 = arith.mulf %36, %37 : vector<32x256xf32>
    %39 = arith.addf %26, %38 : vector<32x256xf32>
    %40 = vector.extract_strided_slice %3 {offsets = [0, 3], sizes = [32, 1], strides = [1, 1]} : vector<32x10xf32> to vector<32x1xf32>
    %41 = vector.extract_strided_slice %33 {offsets = [1, 0], sizes = [1, 256], strides = [1, 1]} : vector<2x256xf32> to vector<1x256xf32>
    %42 = vector.broadcast %40 : vector<32x1xf32> to vector<32x256xf32>
    %43 = vector.broadcast %41 : vector<1x256xf32> to vector<32x256xf32>
    %44 = arith.mulf %42, %43 : vector<32x256xf32>
    %45 = arith.addf %39, %44 : vector<32x256xf32>
    %46 = vector.extract_strided_slice %3 {offsets = [0, 4], sizes = [32, 1], strides = [1, 1]} : vector<32x10xf32> to vector<32x1xf32>
    %47 = vector.extract_strided_slice %1 {offsets = [0, 0], sizes = [1, 256], strides = [1, 1]} : vector<2x256xf32> to vector<1x256xf32>
    %48 = vector.broadcast %46 : vector<32x1xf32> to vector<32x256xf32>
    %49 = vector.broadcast %47 : vector<1x256xf32> to vector<32x256xf32>
    %50 = arith.mulf %48, %49 : vector<32x256xf32>
    %51 = arith.addf %45, %50 : vector<32x256xf32>
    %52 = vector.extract_strided_slice %3 {offsets = [0, 5], sizes = [32, 1], strides = [1, 1]} : vector<32x10xf32> to vector<32x1xf32>
    %53 = vector.extract_strided_slice %1 {offsets = [1, 0], sizes = [1, 256], strides = [1, 1]} : vector<2x256xf32> to vector<1x256xf32>
    %54 = vector.broadcast %52 : vector<32x1xf32> to vector<32x256xf32>
    %55 = vector.broadcast %53 : vector<1x256xf32> to vector<32x256xf32>
    %56 = arith.mulf %54, %55 : vector<32x256xf32>
    %57 = arith.addf %51, %56 : vector<32x256xf32>
    %c255_i32 = arith.constant 255 : i32
    %58 = tpu.dynamic_rotate %1 by %c255_i32 dim 1 : vector<2x256xf32>, i32 -> vector<2x256xf32>
    %c255_i32_10 = arith.constant 255 : i32
    %59 = vector.broadcast %c255_i32_10 : i32 to vector<1x256xi32>
    %60 = arith.cmpi slt, %2, %59 : vector<1x256xi32>
    %cst_11 = arith.constant 0.000000e+00 : f32
    %61 = vector.broadcast %cst_11 : f32 to vector<2x256xf32>
    %62 = vector.shape_cast %60 : vector<1x256xi1> to vector<1x256xi1>
    %63 = vector.broadcast %62 : vector<1x256xi1> to vector<2x256xi1>
    %64 = arith.select %63, %58, %61 : vector<2x256xi1>, vector<2x256xf32>
    %65 = vector.extract_strided_slice %3 {offsets = [0, 6], sizes = [32, 1], strides = [1, 1]} : vector<32x10xf32> to vector<32x1xf32>
    %66 = vector.extract_strided_slice %64 {offsets = [0, 0], sizes = [1, 256], strides = [1, 1]} : vector<2x256xf32> to vector<1x256xf32>
    %67 = vector.broadcast %65 : vector<32x1xf32> to vector<32x256xf32>
    %68 = vector.broadcast %66 : vector<1x256xf32> to vector<32x256xf32>
    %69 = arith.mulf %67, %68 : vector<32x256xf32>
    %70 = arith.addf %57, %69 : vector<32x256xf32>
    %71 = vector.extract_strided_slice %3 {offsets = [0, 7], sizes = [32, 1], strides = [1, 1]} : vector<32x10xf32> to vector<32x1xf32>
    %72 = vector.extract_strided_slice %64 {offsets = [1, 0], sizes = [1, 256], strides = [1, 1]} : vector<2x256xf32> to vector<1x256xf32>
    %73 = vector.broadcast %71 : vector<32x1xf32> to vector<32x256xf32>
    %74 = vector.broadcast %72 : vector<1x256xf32> to vector<32x256xf32>
    %75 = arith.mulf %73, %74 : vector<32x256xf32>
    %76 = arith.addf %70, %75 : vector<32x256xf32>
    %c254_i32 = arith.constant 254 : i32
    %77 = tpu.dynamic_rotate %1 by %c254_i32 dim 1 : vector<2x256xf32>, i32 -> vector<2x256xf32>
    %c254_i32_12 = arith.constant 254 : i32
    %78 = vector.broadcast %c254_i32_12 : i32 to vector<1x256xi32>
    %79 = arith.cmpi slt, %2, %78 : vector<1x256xi32>
    %cst_13 = arith.constant 0.000000e+00 : f32
    %80 = vector.broadcast %cst_13 : f32 to vector<2x256xf32>
    %81 = vector.shape_cast %79 : vector<1x256xi1> to vector<1x256xi1>
    %82 = vector.broadcast %81 : vector<1x256xi1> to vector<2x256xi1>
    %83 = arith.select %82, %77, %80 : vector<2x256xi1>, vector<2x256xf32>
    %84 = vector.extract_strided_slice %3 {offsets = [0, 8], sizes = [32, 1], strides = [1, 1]} : vector<32x10xf32> to vector<32x1xf32>
    %85 = vector.extract_strided_slice %83 {offsets = [0, 0], sizes = [1, 256], strides = [1, 1]} : vector<2x256xf32> to vector<1x256xf32>
    %86 = vector.broadcast %84 : vector<32x1xf32> to vector<32x256xf32>
    %87 = vector.broadcast %85 : vector<1x256xf32> to vector<32x256xf32>
    %88 = arith.mulf %86, %87 : vector<32x256xf32>
    %89 = arith.addf %76, %88 : vector<32x256xf32>
    %90 = vector.extract_strided_slice %3 {offsets = [0, 9], sizes = [32, 1], strides = [1, 1]} : vector<32x10xf32> to vector<32x1xf32>
    %91 = vector.extract_strided_slice %83 {offsets = [1, 0], sizes = [1, 256], strides = [1, 1]} : vector<2x256xf32> to vector<1x256xf32>
    %92 = vector.broadcast %90 : vector<32x1xf32> to vector<32x256xf32>
    %93 = vector.broadcast %91 : vector<1x256xf32> to vector<32x256xf32>
    %94 = arith.mulf %92, %93 : vector<32x256xf32>
    %95 = arith.addf %89, %94 : vector<32x256xf32>
    %cst_14 = arith.constant 0.000000e+00 : f32
    %96 = vector.broadcast %cst_14 : f32 to vector<32x256xf32>
    %97 = arith.maximumf %95, %96 : vector<32x256xf32>
    %c0_15 = arith.constant 0 : index
    %c0_16 = arith.constant 0 : index
    %98 = vector.load %arg4[%c0_15, %c0_16] : memref<32x32xf32, #tpu.memory_space<vmem>>, vector<32x32xf32>
    %cst_17 = arith.constant dense<0.000000e+00> : vector<32x256xf32>
    %99 = tpu.matmul %98, %97, %cst_17 {dimension_numbers = #tpu.dot_dimension_numbers<[1], [0], [0], [1], [0, 0, 1, 1], [], []>} : vector<32x32xf32>, vector<32x256xf32>, vector<32x256xf32> -> vector<32x256xf32>
    %c0_18 = arith.constant 0 : index
    %c0_19 = arith.constant 0 : index
    %100 = vector.load %arg5[%c0_18, %c0_19] : memref<32x1xf32, #tpu.memory_space<vmem>>, vector<32x1xf32>
    %101 = vector.broadcast %100 : vector<32x1xf32> to vector<32x256xf32>
    %102 = arith.addf %99, %101 : vector<32x256xf32>
    %103 = arith.negf %102 : vector<32x256xf32>
    %104 = math.exp %103 : vector<32x256xf32>
    %cst_20 = arith.constant 1.000000e+00 : f32
    %105 = vector.broadcast %cst_20 : f32 to vector<32x256xf32>
    %106 = arith.addf %105, %104 : vector<32x256xf32>
    %107 = arith.divf %105, %106 : vector<32x256xf32>
    %108 = arith.mulf %97, %107 : vector<32x256xf32>
    %c0_21 = arith.constant 0 : index
    %c0_22 = arith.constant 0 : index
    %109 = vector.load %arg6[%c0_21, %c0_22] : memref<10x32xf32, #tpu.memory_space<vmem>>, vector<10x32xf32>
    %cst_23 = arith.constant dense<0.000000e+00> : vector<10x256xf32>
    %110 = tpu.matmul %109, %108, %cst_23 {dimension_numbers = #tpu.dot_dimension_numbers<[1], [0], [0], [1], [0, 0, 1, 1], [], []>} : vector<10x32xf32>, vector<32x256xf32>, vector<10x256xf32> -> vector<10x256xf32>
    %cst_24 = arith.constant 0.000000e+00 : f32
    %111 = vector.broadcast %cst_24 : f32 to vector<2x256xf32>
    %c0_25 = arith.constant 0 : index
    %c0_26 = arith.constant 0 : index
    %112 = vector.load %arg7[%c0_25, %c0_26] : memref<2x1xf32, #tpu.memory_space<vmem>>, vector<2x1xf32>
    %113 = vector.broadcast %112 : vector<2x1xf32> to vector<2x256xf32>
    %114 = arith.addf %111, %113 : vector<2x256xf32>
    %115 = vector.extract_strided_slice %110 {offsets = [0, 0], sizes = [2, 256], strides = [1, 1]} : vector<10x256xf32> to vector<2x256xf32>
    %c2_i32_27 = arith.constant 2 : i32
    %116 = tpu.dynamic_rotate %115 by %c2_i32_27 dim 1 : vector<2x256xf32>, i32 -> vector<2x256xf32>
    %c2_i32_28 = arith.constant 2 : i32
    %117 = vector.broadcast %c2_i32_28 : i32 to vector<1x256xi32>
    %118 = arith.cmpi sge, %2, %117 : vector<1x256xi32>
    %cst_29 = arith.constant 0.000000e+00 : f32
    %119 = vector.broadcast %cst_29 : f32 to vector<2x256xf32>
    %120 = vector.shape_cast %118 : vector<1x256xi1> to vector<1x256xi1>
    %121 = vector.broadcast %120 : vector<1x256xi1> to vector<2x256xi1>
    %122 = arith.select %121, %116, %119 : vector<2x256xi1>, vector<2x256xf32>
    %123 = arith.addf %114, %122 : vector<2x256xf32>
    %124 = vector.extract_strided_slice %110 {offsets = [2, 0], sizes = [2, 256], strides = [1, 1]} : vector<10x256xf32> to vector<2x256xf32>
    %c1_i32_30 = arith.constant 1 : i32
    %125 = tpu.dynamic_rotate %124 by %c1_i32_30 dim 1 : vector<2x256xf32>, i32 -> vector<2x256xf32>
    %c1_i32_31 = arith.constant 1 : i32
    %126 = vector.broadcast %c1_i32_31 : i32 to vector<1x256xi32>
    %127 = arith.cmpi sge, %2, %126 : vector<1x256xi32>
    %cst_32 = arith.constant 0.000000e+00 : f32
    %128 = vector.broadcast %cst_32 : f32 to vector<2x256xf32>
    %129 = vector.shape_cast %127 : vector<1x256xi1> to vector<1x256xi1>
    %130 = vector.broadcast %129 : vector<1x256xi1> to vector<2x256xi1>
    %131 = arith.select %130, %125, %128 : vector<2x256xi1>, vector<2x256xf32>
    %132 = arith.addf %123, %131 : vector<2x256xf32>
    %133 = vector.extract_strided_slice %110 {offsets = [4, 0], sizes = [2, 256], strides = [1, 1]} : vector<10x256xf32> to vector<2x256xf32>
    %134 = arith.addf %132, %133 : vector<2x256xf32>
    %135 = vector.extract_strided_slice %110 {offsets = [6, 0], sizes = [2, 256], strides = [1, 1]} : vector<10x256xf32> to vector<2x256xf32>
    %c255_i32_33 = arith.constant 255 : i32
    %136 = tpu.dynamic_rotate %135 by %c255_i32_33 dim 1 : vector<2x256xf32>, i32 -> vector<2x256xf32>
    %c255_i32_34 = arith.constant 255 : i32
    %137 = vector.broadcast %c255_i32_34 : i32 to vector<1x256xi32>
    %138 = arith.cmpi slt, %2, %137 : vector<1x256xi32>
    %cst_35 = arith.constant 0.000000e+00 : f32
    %139 = vector.broadcast %cst_35 : f32 to vector<2x256xf32>
    %140 = vector.shape_cast %138 : vector<1x256xi1> to vector<1x256xi1>
    %141 = vector.broadcast %140 : vector<1x256xi1> to vector<2x256xi1>
    %142 = arith.select %141, %136, %139 : vector<2x256xi1>, vector<2x256xf32>
    %143 = arith.addf %134, %142 : vector<2x256xf32>
    %144 = vector.extract_strided_slice %110 {offsets = [8, 0], sizes = [2, 256], strides = [1, 1]} : vector<10x256xf32> to vector<2x256xf32>
    %c254_i32_36 = arith.constant 254 : i32
    %145 = tpu.dynamic_rotate %144 by %c254_i32_36 dim 1 : vector<2x256xf32>, i32 -> vector<2x256xf32>
    %c254_i32_37 = arith.constant 254 : i32
    %146 = vector.broadcast %c254_i32_37 : i32 to vector<1x256xi32>
    %147 = arith.cmpi slt, %2, %146 : vector<1x256xi32>
    %cst_38 = arith.constant 0.000000e+00 : f32
    %148 = vector.broadcast %cst_38 : f32 to vector<2x256xf32>
    %149 = vector.shape_cast %147 : vector<1x256xi1> to vector<1x256xi1>
    %150 = vector.broadcast %149 : vector<1x256xi1> to vector<2x256xi1>
    %151 = arith.select %150, %145, %148 : vector<2x256xi1>, vector<2x256xf32>
    %152 = arith.addf %143, %151 : vector<2x256xf32>
    %c0_39 = arith.constant 0 : index
    %c0_40 = arith.constant 0 : index
    %c0_41 = arith.constant 0 : index
    %153 = vector.load %arg8[%c0_39, %c0_40, %c0_41] : memref<1x2x256xf32, #tpu.memory_space<vmem>>, vector<1x2x256xf32>
    %154 = vector.shape_cast %153 : vector<1x2x256xf32> to vector<2x256xf32>
    %155 = vector.shape_cast %152 : vector<2x256xf32> to vector<1x2x256xf32>
    tpu.vector_store %arg8[%c0_39, %c0_40, %c0_41], %155 {strides = array<i32>} : memref<1x2x256xf32, #tpu.memory_space<vmem>>, vector<1x2x256xf32>,
    return
  }
  func.func @transform_0(%arg0: i32) -> (i32, i32, i32) {
    %c0_i32 = arith.constant 0 : i32
    %c0_i32_0 = arith.constant 0 : i32
    %c0_i32_1 = arith.constant 0 : i32
    return %arg0, %c0_i32, %c0_i32_0 : i32, i32, i32
  }
  func.func @transform_1(%arg0: i32) -> (i32, i32) {
    %c0_i32 = arith.constant 0 : i32
    %c0_i32_0 = arith.constant 0 : i32
    %c0_i32_1 = arith.constant 0 : i32
    return %c0_i32, %c0_i32_0 : i32, i32
  }
  func.func @transform_2(%arg0: i32) -> (i32, i32) {
    %c0_i32 = arith.constant 0 : i32
    %c0_i32_0 = arith.constant 0 : i32
    %c0_i32_1 = arith.constant 0 : i32
    return %c0_i32, %c0_i32_0 : i32, i32
  }
  func.func @transform_3(%arg0: i32) -> (i32, i32) {
    %c0_i32 = arith.constant 0 : i32
    %c0_i32_0 = arith.constant 0 : i32
    %c0_i32_1 = arith.constant 0 : i32
    return %c0_i32, %c0_i32_0 : i32, i32
  }
  func.func @transform_4(%arg0: i32) -> (i32, i32) {
    %c0_i32 = arith.constant 0 : i32
    %c0_i32_0 = arith.constant 0 : i32
    %c0_i32_1 = arith.constant 0 : i32
    return %c0_i32, %c0_i32_0 : i32, i32
  }
  func.func @transform_5(%arg0: i32) -> (i32, i32) {
    %c0_i32 = arith.constant 0 : i32
    %c0_i32_0 = arith.constant 0 : i32
    %c0_i32_1 = arith.constant 0 : i32
    return %c0_i32, %c0_i32_0 : i32, i32
  }
  func.func @transform_6(%arg0: i32) -> (i32, i32) {
    %c0_i32 = arith.constant 0 : i32
    %c0_i32_0 = arith.constant 0 : i32
    %c0_i32_1 = arith.constant 0 : i32
    return %c0_i32, %c0_i32_0 : i32, i32
  }
  func.func @transform_7(%arg0: i32) -> (i32, i32, i32) {
    %c0_i32 = arith.constant 0 : i32
    %c0_i32_0 = arith.constant 0 : i32
    %c0_i32_1 = arith.constant 0 : i32
    return %arg0, %c0_i32, %c0_i32_0 : i32, i32, i32
  }
}

</mosaic_0001>

<llo_original>
// kernel: tpu_custom_call.1
$region0: #{tpu_custom_call.1}
  #allocation0 [shape = 'u32[]', space=smem, size = 0x4, offset = 0x4, fixed_abs, tag = 'smem constant byte address 0x4 - core index']
  #allocation1 [shape = 'u32[144,128]{1,0:T(1,128)}', space=vmem, size = 0x12000, scoped, tag = 'internal scratch']
  %s0 = inlined_call_operand.vmem [shape: f32[2,2,256], index: 0, kind: input, shape index: {}]
  %s1 = inlined_call_operand.vmem [shape: f32[32,10], index: 1, kind: input, shape index: {}]
  %s2 = inlined_call_operand.vmem [shape: f32[32,1], index: 2, kind: input, shape index: {}]
  %s3 = inlined_call_operand.vmem [shape: f32[32,32], index: 3, kind: input, shape index: {}]
  %s4 = inlined_call_operand.vmem [shape: f32[32,1], index: 4, kind: input, shape index: {}]
  %s5 = inlined_call_operand.vmem [shape: f32[10,32], index: 5, kind: input, shape index: {}]
  %s6 = inlined_call_operand.vmem [shape: f32[2,1], index: 6, kind: input, shape index: {}]
  %s7 = inlined_call_operand.hbm [shape: f32[2,2,256], index: 7, kind: output, shape index: {}]
  %s8 = sld [smem:[#allocation0]]
  $region61: #{tpu_custom_call.1} parent=0
    _
  %s10 = ssub.s32 1, %s8
  %s11 = scalar_select 0, %s10, %s8
  $region1: #{tpu_custom_call.1} parent=0
    #allocation2 [shape = 'u8[4096]{0}', space=vmem, size = 0x1000, scoped, tag = 'output window, operand 0']
    #allocation3 [shape = 's32[2]{0}', space=sflag, size = 0x8, scoped, tag = 'scoped memory for tpu_custom_call.1']
    %12 = vsyncpa [#allocation3], 0
    %s13 = scalar_lea.sflag [#allocation3], 1
    %14 = vsyncpa %s13, 0
    loop: start=0, step=1, limit=4
    $region2: #{tpu_custom_call.1} parent=1 // loop_pre_header
      _
    $region3: #{tpu_custom_call.1} parent=1 // loop_header
      %s16 = sphi 0, %s20
      %p17 = scmp.ge.s32.totalorder %s16, 4
      %s26 = sphi 0, %s28
      %s29 = sphi 0, %s26
      %s30 = sphi 0, %s29
      %s46 = sphi 0, %s30
      %s50 = sphi 0, %s50
      %s52 = sphi 0, %s50
      %s53 = sphi 0, %s52
      %s67 = sphi 0, %s53
      %s71 = sphi 0, %s71
      %s73 = sphi 0, %s71
      %s74 = sphi 0, %s73
      %s88 = sphi 0, %s74
      %s92 = sphi 0, %s92
      %s94 = sphi 0, %s92
      %s95 = sphi 0, %s94
      %s109 = sphi 0, %s95
      %s113 = sphi 0, %s113
      %s115 = sphi 0, %s113
      %s116 = sphi 0, %s115
      %s130 = sphi 0, %s116
      %s134 = sphi 0, %s134
      %s136 = sphi 0, %s134
      %s137 = sphi 0, %s136
      %s151 = sphi 0, %s137
      %s155 = sphi 0, %s155
      %s157 = sphi 0, %s155
      %s158 = sphi 0, %s157
      %s172 = sphi 0, %s158
      %s178 = sphi 0, %s180
      %s181 = sphi 0, %s178
      %s182 = sphi 0, %s181
      %s198 = sphi 0, %s182
    $region4: #{tpu_custom_call.1} parent=1 // loop_header_branch
      %19 = sbr.rel (%p17) target = $region8
    $region5: #{tpu_custom_call.1} parent=1 // loop_body
      %s21 = ssub.s32 %s16, 1
      %s22 = ssub.s32 %s16, 2
      %s23 = sadd.s32 %s16, 1
      %s24 = ssub.s32 %s16, %s23
      %p25 = scmp.eq.s32.totalorder %s24, 0
      %s27 = sadd.s32 %s26, 1
      %s28 = scalar_select %p25, %s26, %s27
      %p31 = pneg %p25
      %p32 = scmp.eq.s32.totalorder %s16, 1
      %p33 = por %p31, %p32
      %p34 = scmp.ne.s32.totalorder %s26, %s29
      %p35 = scmp.eq.s32.totalorder %s16, 0
      %p36 = por %p34, %p35
      %p37 = scmp.ne.s32.totalorder %s26, %s29
      %p38 = scmp.eq.s32.totalorder %s21, 1
      %p39 = por %p37, %p38
      %p40 = scmp.ne.s32.totalorder %s29, %s30
      %p41 = scmp.eq.s32.totalorder %s21, 0
      %p42 = por %p40, %p41
      %p43 = scmp.ne.s32.totalorder %s29, %s30
      %p44 = scmp.eq.s32.totalorder %s22, 1
      %p45 = por %p43, %p44
      %p47 = scmp.ne.s32.totalorder %s30, %s46
      %p48 = scmp.eq.s32.totalorder %s22, 0
      %p49 = por %p47, %p48
      %s51 = sadd.s32 %s50, 1
      %p54 = scmp.eq.s32.totalorder %s16, 1
      %p55 = scmp.ne.s32.totalorder %s50, %s52
      %p56 = scmp.eq.s32.totalorder %s16, 0
      %p57 = por %p55, %p56
      %p58 = scmp.ne.s32.totalorder %s50, %s52
      %p59 = scmp.eq.s32.totalorder %s21, 1
      %p60 = por %p58, %p59
      %p61 = scmp.ne.s32.totalorder %s52, %s53
      %p62 = scmp.eq.s32.totalorder %s21, 0
      %p63 = por %p61, %p62
      %p64 = scmp.ne.s32.totalorder %s52, %s53
      %p65 = scmp.eq.s32.totalorder %s22, 1
      %p66 = por %p64, %p65
      %p68 = scmp.ne.s32.totalorder %s53, %s67
      %p69 = scmp.eq.s32.totalorder %s22, 0
      %p70 = por %p68, %p69
      %s72 = sadd.s32 %s71, 1
      %p75 = scmp.eq.s32.totalorder %s16, 1
      %p76 = scmp.ne.s32.totalorder %s71, %s73
      %p77 = scmp.eq.s32.totalorder %s16, 0
      %p78 = por %p76, %p77
      %p79 = scmp.ne.s32.totalorder %s71, %s73
      %p80 = scmp.eq.s32.totalorder %s21, 1
      %p81 = por %p79, %p80
      %p82 = scmp.ne.s32.totalorder %s73, %s74
      %p83 = scmp.eq.s32.totalorder %s21, 0
      %p84 = por %p82, %p83
      %p85 = scmp.ne.s32.totalorder %s73, %s74
      %p86 = scmp.eq.s32.totalorder %s22, 1
      %p87 = por %p85, %p86
      %p89 = scmp.ne.s32.totalorder %s74, %s88
      %p90 = scmp.eq.s32.totalorder %s22, 0
      %p91 = por %p89, %p90
      %s93 = sadd.s32 %s92, 1
      %p96 = scmp.eq.s32.totalorder %s16, 1
      %p97 = scmp.ne.s32.totalorder %s92, %s94
      %p98 = scmp.eq.s32.totalorder %s16, 0
      %p99 = por %p97, %p98
      %p100 = scmp.ne.s32.totalorder %s92, %s94
      %p101 = scmp.eq.s32.totalorder %s21, 1
      %p102 = por %p100, %p101
      %p103 = scmp.ne.s32.totalorder %s94, %s95
      %p104 = scmp.eq.s32.totalorder %s21, 0
      %p105 = por %p103, %p104
      %p106 = scmp.ne.s32.totalorder %s94, %s95
      %p107 = scmp.eq.s32.totalorder %s22, 1
      %p108 = por %p106, %p107
      %p110 = scmp.ne.s32.totalorder %s95, %s109
      %p111 = scmp.eq.s32.totalorder %s22, 0
      %p112 = por %p110, %p111
      %s114 = sadd.s32 %s113, 1
      %p117 = scmp.eq.s32.totalorder %s16, 1
      %p118 = scmp.ne.s32.totalorder %s113, %s115
      %p119 = scmp.eq.s32.totalorder %s16, 0
      %p120 = por %p118, %p119
      %p121 = scmp.ne.s32.totalorder %s113, %s115
      %p122 = scmp.eq.s32.totalorder %s21, 1
      %p123 = por %p121, %p122
      %p124 = scmp.ne.s32.totalorder %s115, %s116
      %p125 = scmp.eq.s32.totalorder %s21, 0
      %p126 = por %p124, %p125
      %p127 = scmp.ne.s32.totalorder %s115, %s116
      %p128 = scmp.eq.s32.totalorder %s22, 1
      %p129 = por %p127, %p128
      %p131 = scmp.ne.s32.totalorder %s116, %s130
      %p132 = scmp.eq.s32.totalorder %s22, 0
      %p133 = por %p131, %p132
      %s135 = sadd.s32 %s134, 1
      %p138 = scmp.eq.s32.totalorder %s16, 1
      %p139 = scmp.ne.s32.totalorder %s134, %s136
      %p140 = scmp.eq.s32.totalorder %s16, 0
      %p141 = por %p139, %p140
      %p142 = scmp.ne.s32.totalorder %s134, %s136
      %p143 = scmp.eq.s32.totalorder %s21, 1
      %p144 = por %p142, %p143
      %p145 = scmp.ne.s32.totalorder %s136, %s137
      %p146 = scmp.eq.s32.totalorder %s21, 0
      %p147 = por %p145, %p146
      %p148 = scmp.ne.s32.totalorder %s136, %s137
      %p149 = scmp.eq.s32.totalorder %s22, 1
      %p150 = por %p148, %p149
      %p152 = scmp.ne.s32.totalorder %s137, %s151
      %p153 = scmp.eq.s32.totalorder %s22, 0
      %p154 = por %p152, %p153
      %s156 = sadd.s32 %s155, 1
      %p159 = scmp.eq.s32.totalorder %s16, 1
      %p160 = scmp.ne.s32.totalorder %s155, %s157
      %p161 = scmp.eq.s32.totalorder %s16, 0
      %p162 = por %p160, %p161
      %p163 = scmp.ne.s32.totalorder %s155, %s157
      %p164 = scmp.eq.s32.totalorder %s21, 1
      %p165 = por %p163, %p164
      %p166 = scmp.ne.s32.totalorder %s157, %s158
      %p167 = scmp.eq.s32.totalorder %s21, 0
      %p168 = por %p166, %p167
      %p169 = scmp.ne.s32.totalorder %s157, %s158
      %p170 = scmp.eq.s32.totalorder %s22, 1
      %p171 = por %p169, %p170
      %p173 = scmp.ne.s32.totalorder %s158, %s172
      %p174 = scmp.eq.s32.totalorder %s22, 0
      %p175 = por %p173, %p174
      %s176 = ssub.s32 %s16, %s23
      %p177 = scmp.eq.s32.totalorder %s176, 0
      %s179 = sadd.s32 %s178, 1
      %s180 = scalar_select %p177, %s178, %s179
      %p183 = pneg %p177
      %p184 = scmp.eq.s32.totalorder %s16, 1
      %p185 = por %p183, %p184
      %p186 = scmp.ne.s32.totalorder %s178, %s181
      %p187 = scmp.eq.s32.totalorder %s16, 0
      %p188 = por %p186, %p187
      %p189 = scmp.ne.s32.totalorder %s178, %s181
      %p190 = scmp.eq.s32.totalorder %s21, 1
      %p191 = por %p189, %p190
      %p192 = scmp.ne.s32.totalorder %s181, %s182
      %p193 = scmp.eq.s32.totalorder %s21, 0
      %p194 = por %p192, %p193
      %p195 = scmp.ne.s32.totalorder %s181, %s182
      %p196 = scmp.eq.s32.totalorder %s22, 1
      %p197 = por %p195, %p196
      %p199 = scmp.ne.s32.totalorder %s182, %s198
      %p200 = scmp.eq.s32.totalorder %s22, 0
      %p201 = por %p199, %p200
      %p202 = scmp.le.s32.totalorder 1, %s16
      %p203 = scmp.lt.s32.totalorder %s16, 3
      %p204 = pnand %p202, %p203
      %p205 = pneg %p204
      // Predicated region
      $region9: #{tpu_custom_call.1} parent=5 // pred_check
        _
      $region10: #{tpu_custom_call.1} parent=5 // pred_check_branch
        %207 = sbr.rel (%p204) target = $region12
      $region11: #{tpu_custom_call.1} parent=5 // pred_region
        %s208 = ssub.s32 %s16, 1
        // Predicated region
        $region13: #{tpu_custom_call.1} parent=11 // pred_check
          %p209 = pneg %p63
        $region14: #{tpu_custom_call.1} parent=11 // pred_check_branch
          %211 = sbr.rel (%p209) target = $region16
        $region15: #{tpu_custom_call.1} parent=11 // pred_region
          _
        $region16: #{tpu_custom_call.1} parent=11 // pred_fallthru
          _
        // Predicated region
        $region17: #{tpu_custom_call.1} parent=11 // pred_check
          %p212 = pneg %p84
        $region18: #{tpu_custom_call.1} parent=11 // pred_check_branch
          %214 = sbr.rel (%p212) target = $region20
        $region19: #{tpu_custom_call.1} parent=11 // pred_region
          _
        $region20: #{tpu_custom_call.1} parent=11 // pred_fallthru
          _
        // Predicated region
        $region21: #{tpu_custom_call.1} parent=11 // pred_check
          %p215 = pneg %p105
        $region22: #{tpu_custom_call.1} parent=11 // pred_check_branch
          %217 = sbr.rel (%p215) target = $region24
        $region23: #{tpu_custom_call.1} parent=11 // pred_region
          _
        $region24: #{tpu_custom_call.1} parent=11 // pred_fallthru
          _
        // Predicated region
        $region25: #{tpu_custom_call.1} parent=11 // pred_check
          %p218 = pneg %p126
        $region26: #{tpu_custom_call.1} parent=11 // pred_check_branch
          %220 = sbr.rel (%p218) target = $region28
        $region27: #{tpu_custom_call.1} parent=11 // pred_region
          _
        $region28: #{tpu_custom_call.1} parent=11 // pred_fallthru
          _
        // Predicated region
        $region29: #{tpu_custom_call.1} parent=11 // pred_check
          %p221 = pneg %p147
        $region30: #{tpu_custom_call.1} parent=11 // pred_check_branch
          %223 = sbr.rel (%p221) target = $region32
        $region31: #{tpu_custom_call.1} parent=11 // pred_region
          _
        $region32: #{tpu_custom_call.1} parent=11 // pred_fallthru
          _
        // Predicated region
        $region33: #{tpu_custom_call.1} parent=11 // pred_check
          %p224 = pneg %p168
        $region34: #{tpu_custom_call.1} parent=11 // pred_check_branch
          %226 = sbr.rel (%p224) target = $region36
        $region35: #{tpu_custom_call.1} parent=11 // pred_region
          _
        $region36: #{tpu_custom_call.1} parent=11 // pred_fallthru
          _
      $region12: #{tpu_custom_call.1} parent=5 // pred_fallthru
        _
      %p227 = scmp.lt.s32.totalorder %s16, 2
      // Predicated region
      $region37: #{tpu_custom_call.1} parent=5 // pred_check
        %p228 = pneg %p227
      $region38: #{tpu_custom_call.1} parent=5 // pred_check_branch
        %230 = sbr.rel (%p228) target = $region40
      $region39: #{tpu_custom_call.1} parent=5 // pred_region
        // Predicated region
        $region41: #{tpu_custom_call.1} parent=39 // pred_check
          %p231 = pneg %p36
        $region42: #{tpu_custom_call.1} parent=39 // pred_check_branch
          %233 = sbr.rel (%p231) target = $region44
        $region43: #{tpu_custom_call.1} parent=39 // pred_region
          %p234 = scmp.lt.s32.totalorder %s16, 1
          %s235 = scalar_select %p234, %s16, 1
          %s236 = smul.addr %s235, 2
          %s237 = smul.addr %s236, 2
          %s238 = scalar_lea.vmem %s0, %s237
        $region44: #{tpu_custom_call.1} parent=39 // pred_fallthru
          _
      $region40: #{tpu_custom_call.1} parent=5 // pred_fallthru
        _
      %p239 = scmp.le.s32.totalorder 1, %s16
      %p240 = scmp.lt.s32.totalorder %s16, 3
      %p241 = pnand %p239, %p240
      %p242 = pneg %p241
      // Predicated region
      $region45: #{tpu_custom_call.1} parent=5 // pred_check
        _
      $region46: #{tpu_custom_call.1} parent=5 // pred_check_branch
        %244 = sbr.rel (%p241) target = $region48
      $region47: #{tpu_custom_call.1} parent=5 // pred_region
        %s245 = ssub.s32 %s16, 1
        %p246 = scmp.lt.s32.totalorder %s21, 1
        %s247 = scalar_select %p246, %s21, 1
        %s248 = smul.addr %s247, 2
        %s249 = smul.addr %s248, 2
        %s250 = scalar_lea.vmem %s0, %s249
        %p251 = pneg %p42
        %p252 = pneg %p39
        %p253 = pneg %p63
        %p254 = pneg %p60
        %p255 = pneg %p84
        %p256 = pneg %p81
        %p257 = pneg %p105
        %p258 = pneg %p102
        %p259 = pneg %p126
        %p260 = pneg %p123
        %p261 = pneg %p147
        %p262 = pneg %p144
        %p263 = pneg %p168
        %p264 = pneg %p165
        %p265 = pneg %p194
        %p266 = pneg %p191
        %s267 = sand.u32 %s181, 1
        %s268 = scalar_lea.sflag [#allocation3], %s267
        %s269 = sand.u32 %s181, 1
        %s270 = smul.addr %s269, 4
        %s271 = scalar_lea.vmem [#allocation2], %s270
        %p272 = scmp.lt.s32.totalorder %s21, 1
        %s273 = scalar_select %p272, %s21, 1
        %s274 = smul.addr %s273, 2
        %s275 = smul.addr %s274, 2
        %s276 = scalar_lea.vmem %s0, %s275
        %v277 = vld [vmem:[%s276] sm:$0xf]
        %v278 = vlaneseq
        %v279 = vand.u32 %v278, 127
        %v280 = vadd.s32 %v279, 128
        %v281 = vld [vmem:[%s1] sm:$0xff]
        %v282 = vld [vmem:[%s1 + $0x8] sm:$0xff]
        %v283 = vld [vmem:[%s1 + $0x10] sm:$0xff]
        %v284 = vld [vmem:[%s1 + $0x18] sm:$0xff]
        %v285 = vld [vmem:[%s2] sm:$0xff]
        %v286 = vld [vmem:[%s2 + $0x8] sm:$0xff]
        %v287 = vld [vmem:[%s2 + $0x10] sm:$0xff]
        %v288 = vld [vmem:[%s2 + $0x18] sm:$0xff]
        %290 = vset.pattern.permute.xlu0 0
        %291 = vperm.xlu0 %290, %v285
        %v292 = vpop.permute.xlu0 %291
        %295 = vset.pattern.permute.xlu0 0
        %296 = vperm.xlu0 %295, %v286
        %v297 = vpop.permute.xlu0 %296
        %300 = vset.pattern.permute.xlu0 0
        %301 = vperm.xlu0 %300, %v287
        %v302 = vpop.permute.xlu0 %301
        %305 = vset.pattern.permute.xlu0 0
        %306 = vperm.xlu0 %305, %v288
        %v307 = vpop.permute.xlu0 %306
        %v309 = vadd.f32 %v292, 0.0
        %v310 = vadd.f32 %v297, 0.0
        %v311 = vadd.f32 %v302, 0.0
        %v312 = vadd.f32 %v307, 0.0
        %v315 = vunpack.c.l.s4 1983009808
        %v316 = vunpack.c.0.s8 %v315
        %v317 = vlaneseq
        %v318 = vshrl.u32 %v317, 7
        %v319 = vsub.s32 %v316, %v318
        %v320 = vrot.slane %v277, %v319
        %v321 = vcombine.high %v320, %v320
        %324 = vrot.lane.b32.xlu0 %v320, 2
        %v325 = vpop.permute.xlu0 %324
        %326 = vrot.lane.b32.xlu0 %v321, 2
        %v327 = vpop.permute.xlu0 %326
        %vm328 = vcmp.lt.s32.totalorder %v279, 2
        %v329 = vsel %vm328, %v325, %v327
        %v330 = vsel %vm328, %v327, %v325
        %vm331 = vcmp.ge.s32.totalorder %v279, 2
        %vm332 = vcmp.ge.s32.totalorder %v280, 2
        %v333 = vsel %vm331, 1, 0
        %v334 = vsel %vm332, 1, 0
        %vm335 = vcmp.eq.s32.totalorder %v333, 1
        %vm336 = vcmp.eq.s32.totalorder %v334, 1
        %v337 = vsel %vm335, %v330, 0.0
        %v338 = vsel %vm336, %v329, 0.0
        %340 = vset.pattern.permute.xlu0 0
        %341 = vperm.xlu0 %340, %v281
        %v342 = vpop.permute.xlu0 %341
        %345 = vset.pattern.permute.xlu0 0
        %346 = vperm.xlu0 %345, %v282
        %v347 = vpop.permute.xlu0 %346
        %350 = vset.pattern.permute.xlu0 0
        %351 = vperm.xlu0 %350, %v283
        %v352 = vpop.permute.xlu0 %351
        %355 = vset.pattern.permute.xlu0 0
        %356 = vperm.xlu0 %355, %v284
        %v357 = vpop.permute.xlu0 %356
        %v359 = vlaneseq
        %v360 = vshrl.u32 %v359, 7
        %v361 = vsub.s32 0, %v360
        %v362 = vrot.slane %v337, %v361
        %v363 = vlaneseq
        %v364 = vshrl.u32 %v363, 7
        %v365 = vsub.s32 0, %v364
        %v366 = vrot.slane %v338, %v365
        %v367 = vmul.f32 %v342, %v362
        %v368 = vmul.f32 %v342, %v366
        %v369 = vmul.f32 %v347, %v362
        %v370 = vmul.f32 %v347, %v366
        %v371 = vmul.f32 %v352, %v362
        %v372 = vmul.f32 %v352, %v366
        %v373 = vmul.f32 %v357, %v362
        %v374 = vmul.f32 %v357, %v366
        %v375 = vadd.f32 %v309, %v367
        %v376 = vadd.f32 %v309, %v368
        %v377 = vadd.f32 %v310, %v369
        %v378 = vadd.f32 %v310, %v370
        %v379 = vadd.f32 %v311, %v371
        %v380 = vadd.f32 %v311, %v372
        %v381 = vadd.f32 %v312, %v373
        %v382 = vadd.f32 %v312, %v374
        %383 = vset.pattern.permute.xlu0 1
        %384 = vperm.xlu0 %383, %v281
        %v385 = vpop.permute.xlu0 %384
        %387 = vset.pattern.permute.xlu0 1
        %388 = vperm.xlu0 %387, %v282
        %v389 = vpop.permute.xlu0 %388
        %391 = vset.pattern.permute.xlu0 1
        %392 = vperm.xlu0 %391, %v283
        %v393 = vpop.permute.xlu0 %392
        %395 = vset.pattern.permute.xlu0 1
        %396 = vperm.xlu0 %395, %v284
        %v397 = vpop.permute.xlu0 %396
        %v399 = vlaneseq
        %v400 = vshrl.u32 %v399, 7
        %v401 = vsub.s32 1, %v400
        %v402 = vrot.slane %v337, %v401
        %v403 = vlaneseq
        %v404 = vshrl.u32 %v403, 7
        %v405 = vsub.s32 1, %v404
        %v406 = vrot.slane %v338, %v405
        %v407 = vmul.f32 %v385, %v402
        %v408 = vmul.f32 %v385, %v406
        %v409 = vmul.f32 %v389, %v402
        %v410 = vmul.f32 %v389, %v406
        %v411 = vmul.f32 %v393, %v402
        %v412 = vmul.f32 %v393, %v406
        %v413 = vmul.f32 %v397, %v402
        %v414 = vmul.f32 %v397, %v406
        %v415 = vadd.f32 %v375, %v407
        %v416 = vadd.f32 %v376, %v408
        %v417 = vadd.f32 %v377, %v409
        %v418 = vadd.f32 %v378, %v410
        %v419 = vadd.f32 %v379, %v411
        %v420 = vadd.f32 %v380, %v412
        %v421 = vadd.f32 %v381, %v413
        %v422 = vadd.f32 %v382, %v414
        %423 = vrot.lane.b32.xlu0 %v320, 1
        %v424 = vpop.permute.xlu0 %423
        %425 = vrot.lane.b32.xlu0 %v321, 1
        %v426 = vpop.permute.xlu0 %425
        %vm427 = vcmp.lt.s32.totalorder %v279, 1
        %v428 = vsel %vm427, %v424, %v426
        %v429 = vsel %vm427, %v426, %v424
        %vm430 = vcmp.ge.s32.totalorder %v279, 1
        %vm431 = vcmp.ge.s32.totalorder %v280, 1
        %v432 = vsel %vm430, 1, 0
        %v433 = vsel %vm431, 1, 0
        %vm434 = vcmp.eq.s32.totalorder %v432, 1
        %vm435 = vcmp.eq.s32.totalorder %v433, 1
        %v436 = vsel %vm434, %v429, 0.0
        %v437 = vsel %vm435, %v428, 0.0
        %438 = vset.pattern.permute.xlu0 2
        %439 = vperm.xlu0 %438, %v281
        %v440 = vpop.permute.xlu0 %439
        %442 = vset.pattern.permute.xlu0 2
        %443 = vperm.xlu0 %442, %v282
        %v444 = vpop.permute.xlu0 %443
        %446 = vset.pattern.permute.xlu0 2
        %447 = vperm.xlu0 %446, %v283
        %v448 = vpop.permute.xlu0 %447
        %450 = vset.pattern.permute.xlu0 2
        %451 = vperm.xlu0 %450, %v284
        %v452 = vpop.permute.xlu0 %451
        %v454 = vlaneseq
        %v455 = vshrl.u32 %v454, 7
        %v456 = vsub.s32 0, %v455
        %v457 = vrot.slane %v436, %v456
        %v458 = vlaneseq
        %v459 = vshrl.u32 %v458, 7
        %v460 = vsub.s32 0, %v459
        %v461 = vrot.slane %v437, %v460
        %v462 = vmul.f32 %v440, %v457
        %v463 = vmul.f32 %v440, %v461
        %v464 = vmul.f32 %v444, %v457
        %v465 = vmul.f32 %v444, %v461
        %v466 = vmul.f32 %v448, %v457
        %v467 = vmul.f32 %v448, %v461
        %v468 = vmul.f32 %v452, %v457
        %v469 = vmul.f32 %v452, %v461
        %v470 = vadd.f32 %v415, %v462
        %v471 = vadd.f32 %v416, %v463
        %v472 = vadd.f32 %v417, %v464
        %v473 = vadd.f32 %v418, %v465
        %v474 = vadd.f32 %v419, %v466
        %v475 = vadd.f32 %v420, %v467
        %v476 = vadd.f32 %v421, %v468
        %v477 = vadd.f32 %v422, %v469
        %478 = vset.pattern.permute.xlu0 3
        %479 = vperm.xlu0 %478, %v281
        %v480 = vpop.permute.xlu0 %479
        %482 = vset.pattern.permute.xlu0 3
        %483 = vperm.xlu0 %482, %v282
        %v484 = vpop.permute.xlu0 %483
        %486 = vset.pattern.permute.xlu0 3
        %487 = vperm.xlu0 %486, %v283
        %v488 = vpop.permute.xlu0 %487
        %490 = vset.pattern.permute.xlu0 3
        %491 = vperm.xlu0 %490, %v284
        %v492 = vpop.permute.xlu0 %491
        %v494 = vlaneseq
        %v495 = vshrl.u32 %v494, 7
        %v496 = vsub.s32 1, %v495
        %v497 = vrot.slane %v436, %v496
        %v498 = vlaneseq
        %v499 = vshrl.u32 %v498, 7
        %v500 = vsub.s32 1, %v499
        %v501 = vrot.slane %v437, %v500
        %v502 = vmul.f32 %v480, %v497
        %v503 = vmul.f32 %v480, %v501
        %v504 = vmul.f32 %v484, %v497
        %v505 = vmul.f32 %v484, %v501
        %v506 = vmul.f32 %v488, %v497
        %v507 = vmul.f32 %v488, %v501
        %v508 = vmul.f32 %v492, %v497
        %v509 = vmul.f32 %v492, %v501
        %v510 = vadd.f32 %v470, %v502
        %v511 = vadd.f32 %v471, %v503
        %v512 = vadd.f32 %v472, %v504
        %v513 = vadd.f32 %v473, %v505
        %v514 = vadd.f32 %v474, %v506
        %v515 = vadd.f32 %v475, %v507
        %v516 = vadd.f32 %v476, %v508
        %v517 = vadd.f32 %v477, %v509
        %518 = vset.pattern.permute.xlu0 4
        %519 = vperm.xlu0 %518, %v281
        %v520 = vpop.permute.xlu0 %519
        %522 = vset.pattern.permute.xlu0 4
        %523 = vperm.xlu0 %522, %v282
        %v524 = vpop.permute.xlu0 %523
        %526 = vset.pattern.permute.xlu0 4
        %527 = vperm.xlu0 %526, %v283
        %v528 = vpop.permute.xlu0 %527
        %530 = vset.pattern.permute.xlu0 4
        %531 = vperm.xlu0 %530, %v284
        %v532 = vpop.permute.xlu0 %531
        %v534 = vlaneseq
        %v535 = vshrl.u32 %v534, 7
        %v536 = vsub.s32 0, %v535
        %v537 = vrot.slane %v277, %v536
        %v538 = vlaneseq
        %v539 = vshrl.u32 %v538, 7
        %v540 = vsub.s32 2, %v539
        %v541 = vrot.slane %v277, %v540
        %v544 = vlaneseq
        %v545 = vshrl.u32 %v544, 7
        %v546 = vsub.s32 0, %v545
        %v547 = vrot.slane %v537, %v546
        %v548 = vlaneseq
        %v549 = vshrl.u32 %v548, 7
        %v550 = vsub.s32 0, %v549
        %v551 = vrot.slane %v541, %v550
        %v552 = vmul.f32 %v520, %v547
        %v553 = vmul.f32 %v520, %v551
        %v554 = vmul.f32 %v524, %v547
        %v555 = vmul.f32 %v524, %v551
        %v556 = vmul.f32 %v528, %v547
        %v557 = vmul.f32 %v528, %v551
        %v558 = vmul.f32 %v532, %v547
        %v559 = vmul.f32 %v532, %v551
        %v560 = vadd.f32 %v510, %v552
        %v561 = vadd.f32 %v511, %v553
        %v562 = vadd.f32 %v512, %v554
        %v563 = vadd.f32 %v513, %v555
        %v564 = vadd.f32 %v514, %v556
        %v565 = vadd.f32 %v515, %v557
        %v566 = vadd.f32 %v516, %v558
        %v567 = vadd.f32 %v517, %v559
        %568 = vset.pattern.permute.xlu0 5
        %569 = vperm.xlu0 %568, %v281
        %v570 = vpop.permute.xlu0 %569
        %572 = vset.pattern.permute.xlu0 5
        %573 = vperm.xlu0 %572, %v282
        %v574 = vpop.permute.xlu0 %573
        %576 = vset.pattern.permute.xlu0 5
        %577 = vperm.xlu0 %576, %v283
        %v578 = vpop.permute.xlu0 %577
        %580 = vset.pattern.permute.xlu0 5
        %581 = vperm.xlu0 %580, %v284
        %v582 = vpop.permute.xlu0 %581
        %v584 = vlaneseq
        %v585 = vshrl.u32 %v584, 7
        %v586 = vsub.s32 1, %v585
        %v587 = vrot.slane %v277, %v586
        %v588 = vlaneseq
        %v589 = vshrl.u32 %v588, 7
        %v590 = vsub.s32 3, %v589
        %v591 = vrot.slane %v277, %v590
        %v594 = vlaneseq
        %v595 = vshrl.u32 %v594, 7
        %v596 = vsub.s32 1, %v595
        %v597 = vrot.slane %v587, %v596
        %v598 = vlaneseq
        %v599 = vshrl.u32 %v598, 7
        %v600 = vsub.s32 1, %v599
        %v601 = vrot.slane %v591, %v600
        %v602 = vmul.f32 %v570, %v597
        %v603 = vmul.f32 %v570, %v601
        %v604 = vmul.f32 %v574, %v597
        %v605 = vmul.f32 %v574, %v601
        %v606 = vmul.f32 %v578, %v597
        %v607 = vmul.f32 %v578, %v601
        %v608 = vmul.f32 %v582, %v597
        %v609 = vmul.f32 %v582, %v601
        %v610 = vadd.f32 %v560, %v602
        %v611 = vadd.f32 %v561, %v603
        %v612 = vadd.f32 %v562, %v604
        %v613 = vadd.f32 %v563, %v605
        %v614 = vadd.f32 %v564, %v606
        %v615 = vadd.f32 %v565, %v607
        %v616 = vadd.f32 %v566, %v608
        %v617 = vadd.f32 %v567, %v609
        %618 = vrot.lane.b32.xlu0 %v320, 127
        %v619 = vpop.permute.xlu0 %618
        %620 = vrot.lane.b32.xlu0 %v321, 127
        %v621 = vpop.permute.xlu0 %620
        %vm622 = vcmp.lt.s32.totalorder %v279, 127
        %v623 = vsel %vm622, %v619, %v621
        %v624 = vsel %vm622, %v621, %v619
        %vm625 = vcmp.lt.s32.totalorder %v279, 255
        %vm626 = vcmp.lt.s32.totalorder %v280, 255
        %v627 = vsel %vm625, 1, 0
        %v628 = vsel %vm626, 1, 0
        %vm629 = vcmp.eq.s32.totalorder %v627, 1
        %vm630 = vcmp.eq.s32.totalorder %v628, 1
        %v631 = vsel %vm629, %v623, 0.0
        %v632 = vsel %vm630, %v624, 0.0
        %633 = vset.pattern.permute.xlu0 6
        %634 = vperm.xlu0 %633, %v281
        %v635 = vpop.permute.xlu0 %634
        %637 = vset.pattern.permute.xlu0 6
        %638 = vperm.xlu0 %637, %v282
        %v639 = vpop.permute.xlu0 %638
        %641 = vset.pattern.permute.xlu0 6
        %642 = vperm.xlu0 %641, %v283
        %v643 = vpop.permute.xlu0 %642
        %645 = vset.pattern.permute.xlu0 6
        %646 = vperm.xlu0 %645, %v284
        %v647 = vpop.permute.xlu0 %646
        %v649 = vlaneseq
        %v650 = vshrl.u32 %v649, 7
        %v651 = vsub.s32 0, %v650
        %v652 = vrot.slane %v631, %v651
        %v653 = vlaneseq
        %v654 = vshrl.u32 %v653, 7
        %v655 = vsub.s32 0, %v654
        %v656 = vrot.slane %v632, %v655
        %v657 = vmul.f32 %v635, %v652
        %v658 = vmul.f32 %v635, %v656
        %v659 = vmul.f32 %v639, %v652
        %v660 = vmul.f32 %v639, %v656
        %v661 = vmul.f32 %v643, %v652
        %v662 = vmul.f32 %v643, %v656
        %v663 = vmul.f32 %v647, %v652
        %v664 = vmul.f32 %v647, %v656
        %v665 = vadd.f32 %v610, %v657
        %v666 = vadd.f32 %v611, %v658
        %v667 = vadd.f32 %v612, %v659
        %v668 = vadd.f32 %v613, %v660
        %v669 = vadd.f32 %v614, %v661
        %v670 = vadd.f32 %v615, %v662
        %v671 = vadd.f32 %v616, %v663
        %v672 = vadd.f32 %v617, %v664
        %673 = vset.pattern.permute.xlu0 7
        %674 = vperm.xlu0 %673, %v281
        %v675 = vpop.permute.xlu0 %674
        %677 = vset.pattern.permute.xlu0 7
        %678 = vperm.xlu0 %677, %v282
        %v679 = vpop.permute.xlu0 %678
        %681 = vset.pattern.permute.xlu0 7
        %682 = vperm.xlu0 %681, %v283
        %v683 = vpop.permute.xlu0 %682
        %685 = vset.pattern.permute.xlu0 7
        %686 = vperm.xlu0 %685, %v284
        %v687 = vpop.permute.xlu0 %686
        %v689 = vlaneseq
        %v690 = vshrl.u32 %v689, 7
        %v691 = vsub.s32 1, %v690
        %v692 = vrot.slane %v631, %v691
        %v693 = vlaneseq
        %v694 = vshrl.u32 %v693, 7
        %v695 = vsub.s32 1, %v694
        %v696 = vrot.slane %v632, %v695
        %v697 = vmul.f32 %v675, %v692
        %v698 = vmul.f32 %v675, %v696
        %v699 = vmul.f32 %v679, %v692
        %v700 = vmul.f32 %v679, %v696
        %v701 = vmul.f32 %v683, %v692
        %v702 = vmul.f32 %v683, %v696
        %v703 = vmul.f32 %v687, %v692
        %v704 = vmul.f32 %v687, %v696
        %v705 = vadd.f32 %v665, %v697
        %v706 = vadd.f32 %v666, %v698
        %v707 = vadd.f32 %v667, %v699
        %v708 = vadd.f32 %v668, %v700
        %v709 = vadd.f32 %v669, %v701
        %v710 = vadd.f32 %v670, %v702
        %v711 = vadd.f32 %v671, %v703
        %v712 = vadd.f32 %v672, %v704
        %713 = vrot.lane.b32.xlu0 %v320, 126
        %v714 = vpop.permute.xlu0 %713
        %715 = vrot.lane.b32.xlu0 %v321, 126
        %v716 = vpop.permute.xlu0 %715
        %vm717 = vcmp.lt.s32.totalorder %v279, 126
        %v718 = vsel %vm717, %v714, %v716
        %v719 = vsel %vm717, %v716, %v714
        %vm720 = vcmp.lt.s32.totalorder %v279, 254
        %vm721 = vcmp.lt.s32.totalorder %v280, 254
        %v722 = vsel %vm720, 1, 0
        %v723 = vsel %vm721, 1, 0
        %vm724 = vcmp.eq.s32.totalorder %v722, 1
        %vm725 = vcmp.eq.s32.totalorder %v723, 1
        %v726 = vsel %vm724, %v718, 0.0
        %v727 = vsel %vm725, %v719, 0.0
        %728 = vset.pattern.permute.xlu0 8
        %729 = vperm.xlu0 %728, %v281
        %v730 = vpop.permute.xlu0 %729
        %732 = vset.pattern.permute.xlu0 8
        %733 = vperm.xlu0 %732, %v282
        %v734 = vpop.permute.xlu0 %733
        %736 = vset.pattern.permute.xlu0 8
        %737 = vperm.xlu0 %736, %v283
        %v738 = vpop.permute.xlu0 %737
        %740 = vset.pattern.permute.xlu0 8
        %741 = vperm.xlu0 %740, %v284
        %v742 = vpop.permute.xlu0 %741
        %v744 = vlaneseq
        %v745 = vshrl.u32 %v744, 7
        %v746 = vsub.s32 0, %v745
        %v747 = vrot.slane %v726, %v746
        %v748 = vlaneseq
        %v749 = vshrl.u32 %v748, 7
        %v750 = vsub.s32 0, %v749
        %v751 = vrot.slane %v727, %v750
        %v752 = vmul.f32 %v730, %v747
        %v753 = vmul.f32 %v730, %v751
        %v754 = vmul.f32 %v734, %v747
        %v755 = vmul.f32 %v734, %v751
        %v756 = vmul.f32 %v738, %v747
        %v757 = vmul.f32 %v738, %v751
        %v758 = vmul.f32 %v742, %v747
        %v759 = vmul.f32 %v742, %v751
        %v760 = vadd.f32 %v705, %v752
        %v761 = vadd.f32 %v706, %v753
        %v762 = vadd.f32 %v707, %v754
        %v763 = vadd.f32 %v708, %v755
        %v764 = vadd.f32 %v709, %v756
        %v765 = vadd.f32 %v710, %v757
        %v766 = vadd.f32 %v711, %v758
        %v767 = vadd.f32 %v712, %v759
        %768 = vset.pattern.permute.xlu0 9
        %769 = vperm.xlu0 %768, %v281
        %v770 = vpop.permute.xlu0 %769
        %772 = vset.pattern.permute.xlu0 9
        %773 = vperm.xlu0 %772, %v282
        %v774 = vpop.permute.xlu0 %773
        %776 = vset.pattern.permute.xlu0 9
        %777 = vperm.xlu0 %776, %v283
        %v778 = vpop.permute.xlu0 %777
        %780 = vset.pattern.permute.xlu0 9
        %781 = vperm.xlu0 %780, %v284
        %v782 = vpop.permute.xlu0 %781
        %v784 = vlaneseq
        %v785 = vshrl.u32 %v784, 7
        %v786 = vsub.s32 1, %v785
        %v787 = vrot.slane %v726, %v786
        %v788 = vlaneseq
        %v789 = vshrl.u32 %v788, 7
        %v790 = vsub.s32 1, %v789
        %v791 = vrot.slane %v727, %v790
        %v792 = vmul.f32 %v770, %v787
        %v793 = vmul.f32 %v770, %v791
        %v794 = vmul.f32 %v774, %v787
        %v795 = vmul.f32 %v774, %v791
        %v796 = vmul.f32 %v778, %v787
        %v797 = vmul.f32 %v778, %v791
        %v798 = vmul.f32 %v782, %v787
        %v799 = vmul.f32 %v782, %v791
        %v800 = vadd.f32 %v760, %v792
        %v801 = vadd.f32 %v761, %v793
        %v802 = vadd.f32 %v762, %v794
        %v803 = vadd.f32 %v763, %v795
        %v804 = vadd.f32 %v764, %v796
        %v805 = vadd.f32 %v765, %v797
        %v806 = vadd.f32 %v766, %v798
        %v807 = vadd.f32 %v767, %v799
        %v808 = vmax.f32 %v800, 0.0
        %v809 = vmax.f32 %v801, 0.0
        %v810 = vmax.f32 %v802, 0.0
        %v811 = vmax.f32 %v803, 0.0
        %v812 = vmax.f32 %v804, 0.0
        %v813 = vmax.f32 %v805, 0.0
        %v814 = vmax.f32 %v806, 0.0
        %v815 = vmax.f32 %v807, 0.0
        %v816 = vld [vmem:[%s3] sm:$0xff]
        %v817 = vld [vmem:[%s3 + $0x8] sm:$0xff]
        %v818 = vld [vmem:[%s3 + $0x10] sm:$0xff]
        %v819 = vld [vmem:[%s3 + $0x18] sm:$0xff]
        %v820 = vld [vmem:[%s4] sm:$0xff]
        %v821 = vld [vmem:[%s4 + $0x8] sm:$0xff]
        %v822 = vld [vmem:[%s4 + $0x10] sm:$0xff]
        %v823 = vld [vmem:[%s4 + $0x18] sm:$0xff]
        %825 = vset.pattern.permute.xlu0 0
        %826 = vperm.xlu0 %825, %v820
        %v827 = vpop.permute.xlu0 %826
        %830 = vset.pattern.permute.xlu0 0
        %831 = vperm.xlu0 %830, %v821
        %v832 = vpop.permute.xlu0 %831
        %835 = vset.pattern.permute.xlu0 0
        %836 = vperm.xlu0 %835, %v822
        %v837 = vpop.permute.xlu0 %836
        %840 = vset.pattern.permute.xlu0 0
        %841 = vperm.xlu0 %840, %v823
        %v842 = vpop.permute.xlu0 %841
        %vm844 = vcmask 261120
        %v846 = vsel %vm844, %v816, 0
        %v849 = vsel %vm844, %v817, 0
        %v852 = vsel %vm844, %v818, 0
        %v855 = vsel %vm844, %v819, 0
        %857 = vmatprep.subr.mxu0 %v809
        %858 = vmatpush1.msra.mxu0 %v808
        %859 = vmatprep.subr.mxu0 %v811
        %860 = vmatpush1.msra.mxu0 %v810
        %861 = vmatprep.subr.mxu0 %v813
        %862 = vmatpush1.msra.mxu0 %v812
        %863 = vmatprep.subr.mxu0 %v815
        %864 = vmatpush1.msra.mxu0 %v814
        %865 = vmatprep.subr.mxu0 0.0
        %866 = vmatpush1.msra.mxu0 0.0
        %867 = vmatprep.subr.mxu0 0.0
        %868 = vmatpush1.msra.mxu0 0.0
        %869 = vmatprep.subr.mxu0 0.0
        %870 = vmatpush1.msra.mxu0 0.0
        %871 = vmatprep.subr.mxu0 0.0
        %872 = vmatpush1.msra.mxu0 0.0
        %873 = vmatprep.subr.mxu0 0.0
        %874 = vmatpush1.msra.mxu0 0.0
        %875 = vmatprep.subr.mxu0 0.0
        %876 = vmatpush1.msra.mxu0 0.0
        %877 = vmatprep.subr.mxu0 0.0
        %878 = vmatpush1.msra.mxu0 0.0
        %879 = vmatprep.subr.mxu0 0.0
        %880 = vmatpush1.msra.mxu0 0.0
        %881 = vmatprep.subr.mxu0 0.0
        %882 = vmatpush1.msra.mxu0 0.0
        %883 = vmatprep.subr.mxu0 0.0
        %884 = vmatpush1.msra.mxu0 0.0
        %885 = vmatprep.subr.mxu0 0.0
        %886 = vmatpush1.msra.mxu0 0.0
        %887 = vmatprep.subr.mxu0 0.0
        %888 = vmatpush1.msra.mxu0 0.0
        %889 = vmatprep.subr.mxu0 0.0
        %890 = vmatpush1.msra.mxu0 0.0
        %891 = vmatprep.subr.mxu0 0.0
        %892 = vmatpush1.msra.mxu0 0.0
        %893 = vmatprep.subr.mxu0 0.0
        %894 = vmatpush1.msra.mxu0 0.0
        %895 = vmatprep.subr.mxu0 0.0
        %896 = vmatpush1.msra.mxu0 0.0
        %897 = vmatprep.subr.mxu0 0.0
        %898 = vmatpush1.msra.mxu0 0.0
        %899 = vmatprep.subr.mxu0 0.0
        %900 = vmatpush1.msra.mxu0 0.0
        %901 = vmatprep.subr.mxu0 0.0
        %902 = vmatpush1.msra.mxu0 0.0
        %903 = vmatprep.subr.mxu0 0.0
        %904 = vmatpush1.msra.mxu0 0.0
        %905 = vmatprep.subr.mxu0 0.0
        %906 = vmatpush1.msra.mxu0 0.0
        %907 = vmatprep.subr.mxu0 0.0
        %908 = vmatpush1.msra.mxu0 0.0
        %909 = vmatprep.subr.mxu0 0.0
        %910 = vmatpush1.msra.mxu0 0.0
        %911 = vmatprep.subr.mxu0 0.0
        %912 = vmatpush1.msra.mxu0 0.0
        %913 = vmatprep.subr.mxu0 0.0
        %914 = vmatpush1.msra.mxu0 0.0
        %915 = vmatprep.subr.mxu0 0.0
        %916 = vmatpush1.msra.mxu0 0.0
        %917 = vmatprep.subr.mxu0 0.0
        %918 = vmatpush1.msra.mxu0 0.0
        %919 = vmatprep.subr.mxu0 0.0
        %920 = vmatpush1.msra.mxu0 0.0
        %921 = vmatprep.mubr.f32.mxu0 0.0
        %922 = vmatmul.mubr.f32.gmra.mrb[0].mxu0 %v846
        %v923 = vpop.f32.mrb[0].mxu0
        %v924 = vadd.f32 %v827, %v923
        %v925 = vpop.f32.mrb[0].mxu0
        %v926 = vadd.f32 %v827, %v925
        %927 = vmatprep.mubr.f32.mxu0 0.0
        %928 = vmatmul.mubr.f32.gmra.mrb[0].mxu0 %v849
        %v929 = vpop.f32.mrb[0].mxu0
        %v930 = vadd.f32 %v832, %v929
        %v931 = vpop.f32.mrb[0].mxu0
        %v932 = vadd.f32 %v832, %v931
        %933 = vmatprep.mubr.f32.mxu0 0.0
        %934 = vmatmul.mubr.f32.gmra.mrb[0].mxu0 %v852
        %v935 = vpop.f32.mrb[0].mxu0
        %v936 = vadd.f32 %v837, %v935
        %v937 = vpop.f32.mrb[0].mxu0
        %v938 = vadd.f32 %v837, %v937
        %939 = vmatprep.mubr.f32.mxu0 0.0
        %940 = vmatmul.mubr.f32.gmra.mrb[0].mxu0 %v855
        %v941 = vpop.f32.mrb[0].mxu0
        %v942 = vadd.f32 %v842, %v941
        %v943 = vpop.f32.mrb[0].mxu0
        %v944 = vadd.f32 %v842, %v943
        %945 = vdwg.mxu0
        %v946 = vxor.u32 %v924, 2147483648
        %v947 = vxor.u32 %v926, 2147483648
        %v948 = vxor.u32 %v930, 2147483648
        %v949 = vxor.u32 %v932, 2147483648
        %v950 = vxor.u32 %v936, 2147483648
        %v951 = vxor.u32 %v938, 2147483648
        %v952 = vxor.u32 %v942, 2147483648
        %v953 = vxor.u32 %v944, 2147483648
        %v954 = vmul.f32 %v946, 1.442695
        %v955 = vpow.pop %v954
        %v956 = vmul.f32 %v947, 1.442695
        %v957 = vpow.pop %v956
        %v958 = vmul.f32 %v948, 1.442695
        %v959 = vpow.pop %v958
        %v960 = vmul.f32 %v949, 1.442695
        %v961 = vpow.pop %v960
        %v962 = vmul.f32 %v950, 1.442695
        %v963 = vpow.pop %v962
        %v964 = vmul.f32 %v951, 1.442695
        %v965 = vpow.pop %v964
        %v966 = vmul.f32 %v952, 1.442695
        %v967 = vpow.pop %v966
        %v968 = vmul.f32 %v953, 1.442695
        %v969 = vpow.pop %v968
        %v970 = vadd.f32 %v955, 1.0
        %v971 = vadd.f32 %v957, 1.0
        %v972 = vadd.f32 %v959, 1.0
        %v973 = vadd.f32 %v961, 1.0
        %v974 = vadd.f32 %v963, 1.0
        %v975 = vadd.f32 %v965, 1.0
        %v976 = vadd.f32 %v967, 1.0
        %v977 = vadd.f32 %v969, 1.0
        %v978 = vrcp.pop %v970
        %v979 = vmul.f32 1.0, %v978
        %v980 = vrcp.pop %v971
        %v981 = vmul.f32 1.0, %v980
        %v982 = vrcp.pop %v972
        %v983 = vmul.f32 1.0, %v982
        %v984 = vrcp.pop %v973
        %v985 = vmul.f32 1.0, %v984
        %v986 = vrcp.pop %v974
        %v987 = vmul.f32 1.0, %v986
        %v988 = vrcp.pop %v975
        %v989 = vmul.f32 1.0, %v988
        %v990 = vrcp.pop %v976
        %v991 = vmul.f32 1.0, %v990
        %v992 = vrcp.pop %v977
        %v993 = vmul.f32 1.0, %v992
        %v994 = vmul.f32 %v808, %v979
        %v995 = vmul.f32 %v809, %v981
        %v996 = vmul.f32 %v810, %v983
        %v997 = vmul.f32 %v811, %v985
        %v998 = vmul.f32 %v812, %v987
        %v999 = vmul.f32 %v813, %v989
        %v1000 = vmul.f32 %v814, %v991
        %v1001 = vmul.f32 %v815, %v993
        %v1002 = vld [vmem:[%s5] sm:$0xff]
        %v1003 = vld [vmem:[%s5 + $0x8] sm:$0x3]
        %v1005 = vsel %vm844, %v1002, 0
        %v1008 = vsel %vm844, %v1003, 0
        %1010 = vmatprep.subr.mxu0 %v995
        %1011 = vmatpush1.msra.mxu0 %v994
        %1012 = vmatprep.subr.mxu0 %v997
        %1013 = vmatpush1.msra.mxu0 %v996
        %1014 = vmatprep.subr.mxu0 %v999
        %1015 = vmatpush1.msra.mxu0 %v998
        %1016 = vmatprep.subr.mxu0 %v1001
        %1017 = vmatpush1.msra.mxu0 %v1000
        %1018 = vmatprep.subr.mxu0 0.0
        %1019 = vmatpush1.msra.mxu0 0.0
        %1020 = vmatprep.subr.mxu0 0.0
        %1021 = vmatpush1.msra.mxu0 0.0
        %1022 = vmatprep.subr.mxu0 0.0
        %1023 = vmatpush1.msra.mxu0 0.0
        %1024 = vmatprep.subr.mxu0 0.0
        %1025 = vmatpush1.msra.mxu0 0.0
        %1026 = vmatprep.subr.mxu0 0.0
        %1027 = vmatpush1.msra.mxu0 0.0
        %1028 = vmatprep.subr.mxu0 0.0
        %1029 = vmatpush1.msra.mxu0 0.0
        %1030 = vmatprep.subr.mxu0 0.0
        %1031 = vmatpush1.msra.mxu0 0.0
        %1032 = vmatprep.subr.mxu0 0.0
        %1033 = vmatpush1.msra.mxu0 0.0
        %1034 = vmatprep.subr.mxu0 0.0
        %1035 = vmatpush1.msra.mxu0 0.0
        %1036 = vmatprep.subr.mxu0 0.0
        %1037 = vmatpush1.msra.mxu0 0.0
        %1038 = vmatprep.subr.mxu0 0.0
        %1039 = vmatpush1.msra.mxu0 0.0
        %1040 = vmatprep.subr.mxu0 0.0
        %1041 = vmatpush1.msra.mxu0 0.0
        %1042 = vmatprep.subr.mxu0 0.0
        %1043 = vmatpush1.msra.mxu0 0.0
        %1044 = vmatprep.subr.mxu0 0.0
        %1045 = vmatpush1.msra.mxu0 0.0
        %1046 = vmatprep.subr.mxu0 0.0
        %1047 = vmatpush1.msra.mxu0 0.0
        %1048 = vmatprep.subr.mxu0 0.0
        %1049 = vmatpush1.msra.mxu0 0.0
        %1050 = vmatprep.subr.mxu0 0.0
        %1051 = vmatpush1.msra.mxu0 0.0
        %1052 = vmatprep.subr.mxu0 0.0
        %1053 = vmatpush1.msra.mxu0 0.0
        %1054 = vmatprep.subr.mxu0 0.0
        %1055 = vmatpush1.msra.mxu0 0.0
        %1056 = vmatprep.subr.mxu0 0.0
        %1057 = vmatpush1.msra.mxu0 0.0
        %1058 = vmatprep.subr.mxu0 0.0
        %1059 = vmatpush1.msra.mxu0 0.0
        %1060 = vmatprep.subr.mxu0 0.0
        %1061 = vmatpush1.msra.mxu0 0.0
        %1062 = vmatprep.subr.mxu0 0.0
        %1063 = vmatpush1.msra.mxu0 0.0
        %1064 = vmatprep.subr.mxu0 0.0
        %1065 = vmatpush1.msra.mxu0 0.0
        %1066 = vmatprep.subr.mxu0 0.0
        %1067 = vmatpush1.msra.mxu0 0.0
        %1068 = vmatprep.subr.mxu0 0.0
        %1069 = vmatpush1.msra.mxu0 0.0
        %1070 = vmatprep.subr.mxu0 0.0
        %1071 = vmatpush1.msra.mxu0 0.0
        %1072 = vmatprep.subr.mxu0 0.0
        %1073 = vmatpush1.msra.mxu0 0.0
        %1074 = vmatprep.mubr.f32.mxu0 0.0
        %1075 = vmatmul.mubr.f32.gmra.mrb[0].mxu0 %v1005
        %v1076 = vpop.f32.mrb[0].mxu0
        %v1077 = vadd.f32 0.0, %v1076
        %v1078 = vpop.f32.mrb[0].mxu0
        %v1079 = vadd.f32 0.0, %v1078
        %1080 = vmatprep.mubr.f32.mxu0 0.0
        %1081 = vmatmul.mubr.f32.gmra.mrb[0].mxu0 %v1008
        %v1082 = vpop.f32.mrb[0].mxu0
        %v1083 = vadd.f32 0.0, %v1082
        %v1084 = vpop.f32.mrb[0].mxu0
        %v1085 = vadd.f32 0.0, %v1084
        %1086 = vdwg.mxu0
        %v1087 = vld [vmem:[%s6] sm:$0x3]
        %1089 = vset.pattern.permute.xlu0 0
        %1090 = vperm.xlu0 %1089, %v1087
        %v1091 = vpop.permute.xlu0 %1090
        %v1093 = vadd.f32 %v1091, 0.0
        %1094 = vrot.lane.b32.xlu0 %v1077, 2
        %v1095 = vpop.permute.xlu0 %1094
        %1096 = vrot.lane.b32.xlu0 %v1079, 2
        %v1097 = vpop.permute.xlu0 %1096
        %v1098 = vsel %vm328, %v1095, %v1097
        %v1099 = vsel %vm328, %v1097, %v1095
        %v1100 = vsel %vm335, %v1099, 0.0
        %v1101 = vsel %vm336, %v1098, 0.0
        %v1102 = vadd.f32 %v1093, %v1100
        %v1103 = vadd.f32 %v1093, %v1101
        %v1106 = vrot.slane %v1077, 2
        %v1107 = vrot.slane %v1079, 2
        %1110 = vrot.lane.b32.xlu0 %v1106, 1
        %v1111 = vpop.permute.xlu0 %1110
        %1112 = vrot.lane.b32.xlu0 %v1107, 1
        %v1113 = vpop.permute.xlu0 %1112
        %v1114 = vsel %vm427, %v1111, %v1113
        %v1115 = vsel %vm427, %v1113, %v1111
        %v1116 = vsel %vm434, %v1115, 0.0
        %v1117 = vsel %vm435, %v1114, 0.0
        %v1118 = vadd.f32 %v1102, %v1116
        %v1119 = vadd.f32 %v1103, %v1117
        %v1120 = vrot.slane %v1077, 4
        %v1121 = vrot.slane %v1079, 4
        %v1124 = vadd.f32 %v1118, %v1120
        %v1125 = vadd.f32 %v1119, %v1121
        %v1126 = vrot.slane %v1077, 6
        %v1127 = vrot.slane %v1079, 6
        %1130 = vrot.lane.b32.xlu0 %v1126, 127
        %v1131 = vpop.permute.xlu0 %1130
        %1132 = vrot.lane.b32.xlu0 %v1127, 127
        %v1133 = vpop.permute.xlu0 %1132
        %v1134 = vsel %vm622, %v1131, %v1133
        %v1135 = vsel %vm622, %v1133, %v1131
        %v1136 = vsel %vm629, %v1134, 0.0
        %v1137 = vsel %vm630, %v1135, 0.0
        %v1138 = vadd.f32 %v1124, %v1136
        %v1139 = vadd.f32 %v1125, %v1137
        %1140 = vrot.lane.b32.xlu0 %v1083, 126
        %v1141 = vpop.permute.xlu0 %1140
        %1142 = vrot.lane.b32.xlu0 %v1085, 126
        %v1143 = vpop.permute.xlu0 %1142
        %v1144 = vsel %vm717, %v1141, %v1143
        %v1145 = vsel %vm717, %v1143, %v1141
        %v1146 = vsel %vm724, %v1144, 0.0
        %v1147 = vsel %vm725, %v1145, 0.0
        %v1148 = vadd.f32 %v1138, %v1146
        %v1149 = vadd.f32 %v1139, %v1147
        %v1152 = vcombine.low %v1148, %v1149
        %v1154 = vunpack.c.l.s4 1983009808
        %v1155 = vunpack.c.0.s8 %v1154
        %v1156 = vlaneseq
        %v1157 = vshrl.u32 %v1156, 7
        %v1158 = vsub.s32 %v1155, %v1157
        %v1159 = vrot.slane %v1152, %v1158
        %1161 = vst [vmem:[%s271] sm:$0xf] %v1159
        %s1162 = sand.u32 %s181, 1
        %s1163 = scalar_lea.sflag [#allocation3], %s1162
        %s1164 = sand.u32 %s181, 1
        %s1165 = smul.addr %s1164, 4
        %s1166 = scalar_lea.vmem [#allocation2], %s1165
        // Predicated region
        $region49: #{tpu_custom_call.1} parent=47 // pred_check
          %p1167 = pneg %p191
        $region50: #{tpu_custom_call.1} parent=47 // pred_check_branch
          %1169 = sbr.rel (%p1167) target = $region52
        $region51: #{tpu_custom_call.1} parent=47 // pred_region
          %s1171 = ssub.s32 64, 64
          %1172 = vsyncadd %s1163, %s1171
          %s1173 = smul.addr %s21, 2
          %s1174 = smul.addr %s1173, 32
          %s1175 = scalar_lea.hbm %s7, %s1174
          %s1177 = sshll.u32 %s1166, 4
          %s1178 = int_to_ptr.vmem [resolvable:$true] %s1177
          %1180 = dma.vmem_to_hbm [thread:$0]  %s1178, 64, %s1175, %s1163
        $region52: #{tpu_custom_call.1} parent=47 // pred_fallthru
          _
      $region48: #{tpu_custom_call.1} parent=5 // pred_fallthru
        _
      %p1181 = scmp.le.s32.totalorder 2, %s16
      // Predicated region
      $region53: #{tpu_custom_call.1} parent=5 // pred_check
        %p1182 = pneg %p1181
      $region54: #{tpu_custom_call.1} parent=5 // pred_check_branch
        %1184 = sbr.rel (%p1182) target = $region56
      $region55: #{tpu_custom_call.1} parent=5 // pred_region
        %s1185 = ssub.s32 %s16, 2
        // Predicated region
        $region57: #{tpu_custom_call.1} parent=55 // pred_check
          %p1186 = pneg %p197
        $region58: #{tpu_custom_call.1} parent=55 // pred_check_branch
          %1188 = sbr.rel (%p1186) target = $region60
        $region59: #{tpu_custom_call.1} parent=55 // pred_region
          %s1189 = sand.u32 %s182, 1
          %s1190 = scalar_lea.sflag [#allocation3], %s1189
          %s1191 = sand.u32 %s182, 1
          %s1192 = smul.addr %s1191, 4
          %s1193 = scalar_lea.vmem [#allocation2], %s1192
          %1194 = dma.done %s1190, 64
        $region60: #{tpu_custom_call.1} parent=55 // pred_fallthru
          _
      $region56: #{tpu_custom_call.1} parent=5 // pred_fallthru
        _
    $region6: #{tpu_custom_call.1} parent=1 // loop_footer
      %s20 = sadd.s32 1, %s16
    $region7: #{tpu_custom_call.1} parent=1 // loop_footer_branch
      %15 = sbr.rel target = $region3
    $region8: #{tpu_custom_call.1} parent=1 // loop_exit
      _
    %1195 = vsyncpa [#allocation3], 1
    %s1196 = scalar_lea.sflag [#allocation3], 1
    %1197 = vsyncpa %s1196, 1

</llo_original>
